<compile_context>
chip_gen: v6e
topology: v6e:2x2x1
jax: 0.10.0
libtpu: 0.0.40
codegen_flags: <defaults>
</compile_context>

<pallas_src>
import jax
import jax.numpy as jnp
from jax.experimental import pallas as pl
from jax.experimental.pallas import tpu as pltpu  # noqa: F401  (kept for harness imports)


def fused_linear_scale_cancel_kernel(v1_ref, wt_ref, b_ref, o_ref):
    """v2 = v1 @ wt + b ; z2 = 2*v2 ; out = z2 + (-z2).

    v1_ref: (2, 2)  already-permuted input (x1.permute(0,2,1) squeezed)
    wt_ref: (2, 2)  weight.T
    b_ref : (1, 2)  bias, row vector for sublane broadcast
    o_ref : (2, 2)
    """
    v1 = v1_ref[...]
    wt = wt_ref[...]
    # Unrolled K=2 contraction on the VPU: (2,1) * (1,2) broadcasts.
    v2 = v1[:, 0:1] * wt[0:1, :] + v1[:, 1:2] * wt[1:2, :] + b_ref[...]
    z2 = v2 * 2.0
    z3 = -z2
    o_ref[...] = z2 + z3  # identically 0 for finite v2; NaN/inf propagate as in the reference


@jax.jit
def model_forward(x1, weight, bias):
    # Layout plumbing (permute / transpose / reshape) stays in the wrapper.
    v1 = jnp.transpose(x1, (0, 2, 1)).reshape(2, 2)
    wt = weight.T
    b2 = bias.reshape(1, 2)
    out2d = pl.pallas_call(
        fused_linear_scale_cancel_kernel,
        out_shape=jax.ShapeDtypeStruct((2, 2), jnp.float32),
    )(v1, wt, b2)
    return out2d.reshape(1, 2, 2)


if __name__ == "__main__":
    key = jax.random.PRNGKey(0)
    k_x, k_w, k_b = jax.random.split(key, 3)

    # x1 is drawn inside the PyTorch forward; materialize it deterministically here.
    x1 = jax.random.normal(k_x, (1, 2, 2), dtype=jnp.float32)
    # nn.Linear(2, 2) default init: U(-1/sqrt(in_features), 1/sqrt(in_features))
    bound = 1.0 / jnp.sqrt(2.0)
    weight = jax.random.uniform(k_w, (2, 2), jnp.float32, -bound, bound)
    bias = jax.random.uniform(k_b, (2,), jnp.float32, -bound, bound)

    out = model_forward(x1, weight, bias)
    out = jax.block_until_ready(out)

    # Plain-JAX reference of the full pipeline (permute -> linear -> *2 -> negate -> add).
    v1 = jnp.transpose(x1, (0, 2, 1))
    v2 = v1 @ weight.T + bias
    z2 = v2 * 2.0
    ref = z2 + (-z2)

    assert out.shape == (1, 2, 2)
    assert out.dtype == jnp.float32
    assert jnp.allclose(out, ref, atol=1e-6)
    assert bool(jnp.all(out == 0.0))

    print("KERNEL_OK")
</pallas_src>

<mosaic_0001>
module attributes {stable_mosaic.version = 11 : i64} {
  func.func @fused_linear_scale_cancel_kernel(%arg0: memref<2x2xf32, #tpu.memory_space<vmem>>, %arg1: memref<2x2xf32, #tpu.memory_space<vmem>>, %arg2: memref<1x2xf32, #tpu.memory_space<vmem>>, %arg3: memref<2x2xf32, #tpu.memory_space<vmem>>) attributes {dimension_semantics = [], scalar_prefetch = 0 : i64, scratch_operands = 0 : i64, tpu.core_type = #tpu.core_type<tc>} {
    %c0 = arith.constant 0 : index
    %c0_0 = arith.constant 0 : index
    %0 = vector.load %arg0[%c0, %c0_0] : memref<2x2xf32, #tpu.memory_space<vmem>>, vector<2x2xf32>
    %c0_1 = arith.constant 0 : index
    %c0_2 = arith.constant 0 : index
    %1 = vector.load %arg1[%c0_1, %c0_2] : memref<2x2xf32, #tpu.memory_space<vmem>>, vector<2x2xf32>
    %2 = vector.extract_strided_slice %0 {offsets = [0, 0], sizes = [2, 1], strides = [1, 1]} : vector<2x2xf32> to vector<2x1xf32>
    %3 = vector.extract_strided_slice %1 {offsets = [0, 0], sizes = [1, 2], strides = [1, 1]} : vector<2x2xf32> to vector<1x2xf32>
    %4 = vector.broadcast %2 : vector<2x1xf32> to vector<2x2xf32>
    %5 = vector.broadcast %3 : vector<1x2xf32> to vector<2x2xf32>
    %6 = arith.mulf %4, %5 : vector<2x2xf32>
    %7 = vector.extract_strided_slice %0 {offsets = [0, 1], sizes = [2, 1], strides = [1, 1]} : vector<2x2xf32> to vector<2x1xf32>
    %8 = vector.extract_strided_slice %1 {offsets = [1, 0], sizes = [1, 2], strides = [1, 1]} : vector<2x2xf32> to vector<1x2xf32>
    %9 = vector.broadcast %7 : vector<2x1xf32> to vector<2x2xf32>
    %10 = vector.broadcast %8 : vector<1x2xf32> to vector<2x2xf32>
    %11 = arith.mulf %9, %10 : vector<2x2xf32>
    %12 = arith.addf %6, %11 : vector<2x2xf32>
    %c0_3 = arith.constant 0 : index
    %c0_4 = arith.constant 0 : index
    %13 = vector.load %arg2[%c0_3, %c0_4] : memref<1x2xf32, #tpu.memory_space<vmem>>, vector<1x2xf32>
    %14 = vector.broadcast %13 : vector<1x2xf32> to vector<2x2xf32>
    %15 = arith.addf %12, %14 : vector<2x2xf32>
    %cst = arith.constant 2.000000e+00 : f32
    %16 = vector.broadcast %cst : f32 to vector<2x2xf32>
    %17 = arith.mulf %15, %16 : vector<2x2xf32>
    %cst_5 = arith.constant 0.000000e+00 : f32
    %18 = vector.broadcast %cst_5 : f32 to vector<2x2xf32>
    %19 = arith.subf %18, %17 : vector<2x2xf32>
    %20 = arith.addf %17, %19 : vector<2x2xf32>
    %c0_6 = arith.constant 0 : index
    %c0_7 = arith.constant 0 : index
    %21 = vector.load %arg3[%c0_6, %c0_7] : memref<2x2xf32, #tpu.memory_space<vmem>>, vector<2x2xf32>
    tpu.vector_store %arg3[%c0_6, %c0_7], %20 {strides = array<i32>} : memref<2x2xf32, #tpu.memory_space<vmem>>, vector<2x2xf32>,
    return
  }
}

</mosaic_0001>

<llo_original>
// kernel: model_forward.1
$region0: #{model_forward.1}
  #allocation0 [shape = 'u32[]', space=smem, size = 0x4, offset = 0x4, fixed_abs, tag = 'smem constant byte address 0x4 - core index']
  #allocation1 [shape = 'u32[144,128]{1,0:T(1,128)}', space=vmem, size = 0x12000, scoped, tag = 'internal scratch']
  %s0 = inlined_call_operand.vmem [shape: f32[2,2], index: 0, kind: input, shape index: {}]
  %s1 = inlined_call_operand.vmem [shape: f32[2,2], index: 1, kind: input, shape index: {}]
  %s2 = inlined_call_operand.vmem [shape: f32[1,2], index: 2, kind: input, shape index: {}]
  %s3 = inlined_call_operand.hbm [shape: f32[2,2], index: 3, kind: output, shape index: {}]
  %s4 = sld [smem:[#allocation0]]
  $region22: #{model_forward.1} parent=0
    _
  %s6 = ssub.s32 1, %s4
  %s7 = scalar_select 0, %s6, %s4
  $region1: #{model_forward.1} parent=0
    #allocation2 [shape = 'u8[1024]{0}', space=vmem, size = 0x400, scoped, tag = 'output window, operand 0, single buffered']
    #allocation3 [shape = 's32[1]{0}', space=sflag, size = 0x4, scoped, tag = 'scoped memory for model_forward.1']
    %8 = vsyncpa [#allocation3], 0
    // Predicated region
    $region2: #{model_forward.1} parent=1 // pred_check
      _
    $region3: #{model_forward.1} parent=1 // pred_check_branch
      %10 = sbr.rel (0) target = $region5
    $region4: #{model_forward.1} parent=1 // pred_region
      _
    $region5: #{model_forward.1} parent=1 // pred_fallthru
      _
    // Predicated region
    $region6: #{model_forward.1} parent=1 // pred_check
      _
    $region7: #{model_forward.1} parent=1 // pred_check_branch
      %12 = sbr.rel (0) target = $region9
    $region8: #{model_forward.1} parent=1 // pred_region
      _
    $region9: #{model_forward.1} parent=1 // pred_fallthru
      _
    // Predicated region
    $region10: #{model_forward.1} parent=1 // pred_check
      _
    $region11: #{model_forward.1} parent=1 // pred_check_branch
      %14 = sbr.rel (0) target = $region13
    $region12: #{model_forward.1} parent=1 // pred_region
      _
    $region13: #{model_forward.1} parent=1 // pred_fallthru
      _
    %v15 = vld [vmem:[%s0] sm:$0x3]
    %v16 = vld [vmem:[%s1] sm:$0x3]
    %18 = vset.pattern.permute.xlu0 0
    %19 = vperm.xlu0 %18, %v15
    %v20 = vpop.permute.xlu0 %19
    %v22 = vlaneseq
    %v23 = vshrl.u32 %v22, 7
    %v24 = vsub.s32 0, %v23
    %v25 = vrot.slane %v16, %v24
    %v26 = vmul.f32 %v20, %v25
    %27 = vset.pattern.permute.xlu0 1
    %28 = vperm.xlu0 %27, %v15
    %v29 = vpop.permute.xlu0 %28
    %v31 = vlaneseq
    %v32 = vshrl.u32 %v31, 7
    %v33 = vsub.s32 1, %v32
    %v34 = vrot.slane %v16, %v33
    %v35 = vmul.f32 %v29, %v34
    %v36 = vadd.f32 %v26, %v35
    %v37 = vld [vmem:[%s2] sm:$0x1]
    %v39 = vlaneseq
    %v40 = vshrl.u32 %v39, 7
    %v41 = vsub.s32 0, %v40
    %v42 = vrot.slane %v37, %v41
    %v44 = vadd.f32 %v36, %v42
    %v45 = vmul.f32 %v44, 2.0
    %v46 = vsub.f32 0.0, %v45
    %v47 = vadd.f32 %v45, %v46
    %vm48 = vcmask 9216
    %49 = vst.msk [vmem:[#allocation2] sm:$0x3] %vm48, %v47
    // Predicated region
    $region14: #{model_forward.1} parent=1 // pred_check
      _
    $region15: #{model_forward.1} parent=1 // pred_check_branch
      %51 = sbr.rel (0) target = $region17
    $region16: #{model_forward.1} parent=1 // pred_region
      %s53 = ssub.s32 32, 32
      %54 = vsyncadd [#allocation3], %s53
      %s56 = sshll.u32 [#allocation2], 4
      %s57 = int_to_ptr.vmem [resolvable:$true] %s56
      %59 = dma.vmem_to_hbm [thread:$0]  %s57, 32, %s3, [#allocation3]
    $region17: #{model_forward.1} parent=1 // pred_fallthru
      _
    // Predicated region
    $region18: #{model_forward.1} parent=1 // pred_check
      _
    $region19: #{model_forward.1} parent=1 // pred_check_branch
      %61 = sbr.rel (0) target = $region21
    $region20: #{model_forward.1} parent=1 // pred_region
      %62 = dma.done [#allocation3], 32
    $region21: #{model_forward.1} parent=1 // pred_fallthru
      _
    %63 = vsyncpa [#allocation3], 1

</llo_original>
